<compile_context>
chip_gen: v7x
topology: tpu7x:2x2x1
jax: 0.10.0
libtpu: 0.0.40
codegen_flags: <defaults>
</compile_context>

<pallas_src>
import jax
import jax.numpy as jnp
from jax.experimental import pallas as pl
from jax.experimental.pallas import tpu as pltpu


INPUT_DIM = 23
HIDDEN_DIM = 64
OUTPUT_DIM = 2
N_HIDDEN_LAYERS = 2  # fixed by the module default; kernel hardcodes 2 hidden layers


def _round_up(n, m):
    return (n + m - 1) // m * m


def mlp_kernel(x_ref,
               w_in_ref, b_in_ref,
               w_h0_ref, b_h0_ref,
               w_h1_ref, b_h1_ref,
               w_out_ref, b_out_ref,
               o_ref):
    """Full MLP forward for one batch tile: 4 bf16 matmuls (f32 acc) + ReLUs + 2-class softmax."""
    # input layer + ReLU  (x and weights are bf16, accumulate in f32)
    h = jnp.dot(x_ref[...], w_in_ref[...], preferred_element_type=jnp.float32)
    h = jnp.maximum(h + b_in_ref[...], 0.0)

    # hidden layer 0 + ReLU
    h = jnp.dot(h.astype(jnp.bfloat16), w_h0_ref[...],
                preferred_element_type=jnp.float32)
    h = jnp.maximum(h + b_h0_ref[...], 0.0)

    # hidden layer 1 + ReLU
    h = jnp.dot(h.astype(jnp.bfloat16), w_h1_ref[...],
                preferred_element_type=jnp.float32)
    h = jnp.maximum(h + b_h1_ref[...], 0.0)

    # output layer (2 logits)
    logits = jnp.dot(h.astype(jnp.bfloat16), w_out_ref[...],
                     preferred_element_type=jnp.float32) + b_out_ref[...]

    # 2-class softmax in closed form: p1 = sigmoid(l1 - l0), p0 = 1 - p1.
    # No cross-lane reductions, numerically stable for any logit difference.
    d = logits[:, 1:2] - logits[:, 0:1]                      # (bt, 1)
    p1 = pl.reciprocal(1.0 + jnp.exp(-d), approx=True)        # EUP exp + EUP recip
    p0 = 1.0 - p1
    # TODO(synk): output last dim is 2 -> store is still lane-masked; writeback is
    # only 8 bytes/row so this is negligible vs. the matmul + input DMA cost here.
    o_ref[:, 0:1] = p0.astype(o_ref.dtype)
    o_ref[:, 1:2] = p1.astype(o_ref.dtype)


def mlp_forward(x, params, *, batch_tile=1024):
    """Run the MLP forward pass.  params are f32, stored as (in, out) weights and (1, out) biases."""
    (w_in, b_in), (w_h0, b_h0), (w_h1, b_h1), (w_out, b_out) = params

    B = x.shape[0]
    assert x.shape[1] == INPUT_DIM
    assert batch_tile >= 8

    # Batch tile: multiple of 8 sublanes, capped by the (padded) batch size so
    # small demo batches still work; large batches get many grid steps.
    bt = _round_up(min(batch_tile, _round_up(B, 8)), 8)
    Bp = _round_up(B, bt)

    # bf16 input stream (halves HBM bytes of the dominant DMA) + bf16 weights.
    x_bf = x.astype(jnp.bfloat16)
    if Bp != B:
        x_bf = jnp.pad(x_bf, ((0, Bp - B), (0, 0)))
    w_in_b = w_in.astype(jnp.bfloat16)
    w_h0_b = w_h0.astype(jnp.bfloat16)
    w_h1_b = w_h1.astype(jnp.bfloat16)
    w_out_b = w_out.astype(jnp.bfloat16)

    def full_spec(arr):
        # whole 2-D array, same (resident) block for every grid step
        return pl.BlockSpec(arr.shape, lambda i: (0, 0))

    grid = (Bp // bt,)
    out = pl.pallas_call(
        mlp_kernel,
        out_shape=jax.ShapeDtypeStruct((Bp, OUTPUT_DIM), jnp.float32),
        grid_spec=pltpu.PrefetchScalarGridSpec(
            num_scalar_prefetch=0,
            grid=grid,
            in_specs=[
                pl.BlockSpec((bt, INPUT_DIM), lambda i: (i, 0)),
                full_spec(w_in_b), full_spec(b_in),
                full_spec(w_h0_b), full_spec(b_h0),
                full_spec(w_h1_b), full_spec(b_h1),
                full_spec(w_out_b), full_spec(b_out),
            ],
            out_specs=pl.BlockSpec((bt, OUTPUT_DIM), lambda i: (i, 0)),
        ),
        compiler_params=pltpu.CompilerParams(
            dimension_semantics=("parallel",)),
    )(x_bf, w_in_b, b_in, w_h0_b, b_h0, w_h1_b, b_h1, w_out_b, b_out)

    return out[:B]


def init_params(key):
    """Deterministic init mimicking torch.nn.Linear's U(-1/sqrt(fan_in), 1/sqrt(fan_in)).
    Weights stored as (in_features, out_features); biases as (1, out_features). f32 master copy."""
    dims = [(INPUT_DIM, HIDDEN_DIM),
            (HIDDEN_DIM, HIDDEN_DIM),
            (HIDDEN_DIM, HIDDEN_DIM),
            (HIDDEN_DIM, OUTPUT_DIM)]
    params = []
    for (fan_in, fan_out) in dims:
        key, kw, kb = jax.random.split(key, 3)
        bound = 1.0 / jnp.sqrt(jnp.float32(fan_in))
        w = jax.random.uniform(kw, (fan_in, fan_out), jnp.float32, -bound, bound)
        b = jax.random.uniform(kb, (1, fan_out), jnp.float32, -bound, bound)
        params.append((w, b))
    return params


def mlp_reference(x, params):
    """f32 reference using the same bf16-rounded weights/input the kernel consumes."""
    h = x.astype(jnp.bfloat16).astype(jnp.float32)
    for i, (w, b) in enumerate(params):
        w = w.astype(jnp.bfloat16).astype(jnp.float32)
        h = h @ w + b
        if i < len(params) - 1:
            h = jnp.maximum(h, 0.0)
    return jax.nn.softmax(h, axis=-1)


if __name__ == "__main__":
    key = jax.random.PRNGKey(0)
    key, kx = jax.random.split(key)
    params = init_params(key)

    # Small demo batch (single grid step).
    B = 8
    x = jax.random.normal(kx, (B, INPUT_DIM), jnp.float32)
    out = jax.block_until_ready(mlp_forward(x, params))
    ref = mlp_reference(x, params)
    assert out.shape == (B, OUTPUT_DIM)
    assert jnp.allclose(jnp.sum(out, axis=-1), 1.0, atol=1e-5), "softmax rows must sum to 1"
    assert jnp.allclose(out, ref, atol=3e-2), "mismatch vs JAX reference (bf16 path)"

    # Multi-step grid with batch padding (exercises the tiling / pipeline path).
    key, kx2 = jax.random.split(key)
    B2 = 40
    x2 = jax.random.normal(kx2, (B2, INPUT_DIM), jnp.float32)
    out2 = jax.block_until_ready(mlp_forward(x2, params, batch_tile=16))
    ref2 = mlp_reference(x2, params)
    assert out2.shape == (B2, OUTPUT_DIM)
    assert jnp.allclose(jnp.sum(out2, axis=-1), 1.0, atol=1e-5), "softmax rows must sum to 1"
    assert jnp.allclose(out2, ref2, atol=3e-2), "mismatch vs JAX reference (tiled path)"

    print("KERNEL_OK")
</pallas_src>

<mosaic_0001>
module attributes {stable_mosaic.version = 11 : i64} {
  func.func @mlp_kernel(%arg0: i32, %arg1: memref<8x23xbf16, #tpu.memory_space<vmem>>, %arg2: memref<23x64xbf16, #tpu.memory_space<vmem>>, %arg3: memref<1x64xf32, #tpu.memory_space<vmem>>, %arg4: memref<64x64xbf16, #tpu.memory_space<vmem>>, %arg5: memref<1x64xf32, #tpu.memory_space<vmem>>, %arg6: memref<64x64xbf16, #tpu.memory_space<vmem>>, %arg7: memref<1x64xf32, #tpu.memory_space<vmem>>, %arg8: memref<64x2xbf16, #tpu.memory_space<vmem>>, %arg9: memref<1x2xf32, #tpu.memory_space<vmem>>, %arg10: memref<8x2xf32, #tpu.memory_space<vmem>>) attributes {dimension_semantics = [#tpu.dimension_semantics<parallel>], iteration_bounds = array<i64: 1>, scalar_prefetch = 0 : i64, scratch_operands = 0 : i64, tpu.core_type = #tpu.core_type<tc>, window_params = [{transform_indices = @transform_0, window_bounds = array<i64: 8, 23>}, {pipeline_mode = #tpu.pipeline_mode<synchronous>, transform_indices = @transform_1, window_bounds = array<i64: 23, 64>}, {pipeline_mode = #tpu.pipeline_mode<synchronous>, transform_indices = @transform_2, window_bounds = array<i64: 1, 64>}, {pipeline_mode = #tpu.pipeline_mode<synchronous>, transform_indices = @transform_3, window_bounds = array<i64: 64, 64>}, {pipeline_mode = #tpu.pipeline_mode<synchronous>, transform_indices = @transform_4, window_bounds = array<i64: 1, 64>}, {pipeline_mode = #tpu.pipeline_mode<synchronous>, transform_indices = @transform_5, window_bounds = array<i64: 64, 64>}, {pipeline_mode = #tpu.pipeline_mode<synchronous>, transform_indices = @transform_6, window_bounds = array<i64: 1, 64>}, {pipeline_mode = #tpu.pipeline_mode<synchronous>, transform_indices = @transform_7, window_bounds = array<i64: 64, 2>}, {pipeline_mode = #tpu.pipeline_mode<synchronous>, transform_indices = @transform_8, window_bounds = array<i64: 1, 2>}, {transform_indices = @transform_9, window_bounds = array<i64: 8, 2>}]} {
    %c0 = arith.constant 0 : index
    %c0_0 = arith.constant 0 : index
    %0 = vector.load %arg1[%c0, %c0_0] : memref<8x23xbf16, #tpu.memory_space<vmem>>, vector<8x23xbf16>
    %c0_1 = arith.constant 0 : index
    %c0_2 = arith.constant 0 : index
    %1 = vector.load %arg2[%c0_1, %c0_2] : memref<23x64xbf16, #tpu.memory_space<vmem>>, vector<23x64xbf16>
    %cst = arith.constant dense<0.000000e+00> : vector<8x64xf32>
    %2 = tpu.matmul %0, %1, %cst {dimension_numbers = #tpu.dot_dimension_numbers<[1], [0], [0], [1], [0, 0, 1, 1], [], []>} : vector<8x23xbf16>, vector<23x64xbf16>, vector<8x64xf32> -> vector<8x64xf32>
    %c0_3 = arith.constant 0 : index
    %c0_4 = arith.constant 0 : index
    %3 = vector.load %arg3[%c0_3, %c0_4] : memref<1x64xf32, #tpu.memory_space<vmem>>, vector<1x64xf32>
    %4 = vector.broadcast %3 : vector<1x64xf32> to vector<8x64xf32>
    %5 = arith.addf %2, %4 : vector<8x64xf32>
    %cst_5 = arith.constant 0.000000e+00 : f32
    %6 = vector.broadcast %cst_5 : f32 to vector<8x64xf32>
    %7 = arith.maximumf %5, %6 : vector<8x64xf32>
    %8 = arith.truncf %7 : vector<8x64xf32> to vector<8x64xbf16>
    %c0_6 = arith.constant 0 : index
    %c0_7 = arith.constant 0 : index
    %9 = vector.load %arg4[%c0_6, %c0_7] : memref<64x64xbf16, #tpu.memory_space<vmem>>, vector<64x64xbf16>
    %cst_8 = arith.constant dense<0.000000e+00> : vector<8x64xf32>
    %10 = tpu.matmul %8, %9, %cst_8 {dimension_numbers = #tpu.dot_dimension_numbers<[1], [0], [0], [1], [0, 0, 1, 1], [], []>} : vector<8x64xbf16>, vector<64x64xbf16>, vector<8x64xf32> -> vector<8x64xf32>
    %c0_9 = arith.constant 0 : index
    %c0_10 = arith.constant 0 : index
    %11 = vector.load %arg5[%c0_9, %c0_10] : memref<1x64xf32, #tpu.memory_space<vmem>>, vector<1x64xf32>
    %12 = vector.broadcast %11 : vector<1x64xf32> to vector<8x64xf32>
    %13 = arith.addf %10, %12 : vector<8x64xf32>
    %cst_11 = arith.constant 0.000000e+00 : f32
    %14 = vector.broadcast %cst_11 : f32 to vector<8x64xf32>
    %15 = arith.maximumf %13, %14 : vector<8x64xf32>
    %16 = arith.truncf %15 : vector<8x64xf32> to vector<8x64xbf16>
    %c0_12 = arith.constant 0 : index
    %c0_13 = arith.constant 0 : index
    %17 = vector.load %arg6[%c0_12, %c0_13] : memref<64x64xbf16, #tpu.memory_space<vmem>>, vector<64x64xbf16>
    %cst_14 = arith.constant dense<0.000000e+00> : vector<8x64xf32>
    %18 = tpu.matmul %16, %17, %cst_14 {dimension_numbers = #tpu.dot_dimension_numbers<[1], [0], [0], [1], [0, 0, 1, 1], [], []>} : vector<8x64xbf16>, vector<64x64xbf16>, vector<8x64xf32> -> vector<8x64xf32>
    %c0_15 = arith.constant 0 : index
    %c0_16 = arith.constant 0 : index
    %19 = vector.load %arg7[%c0_15, %c0_16] : memref<1x64xf32, #tpu.memory_space<vmem>>, vector<1x64xf32>
    %20 = vector.broadcast %19 : vector<1x64xf32> to vector<8x64xf32>
    %21 = arith.addf %18, %20 : vector<8x64xf32>
    %cst_17 = arith.constant 0.000000e+00 : f32
    %22 = vector.broadcast %cst_17 : f32 to vector<8x64xf32>
    %23 = arith.maximumf %21, %22 : vector<8x64xf32>
    %24 = arith.truncf %23 : vector<8x64xf32> to vector<8x64xbf16>
    %c0_18 = arith.constant 0 : index
    %c0_19 = arith.constant 0 : index
    %25 = vector.load %arg8[%c0_18, %c0_19] : memref<64x2xbf16, #tpu.memory_space<vmem>>, vector<64x2xbf16>
    %cst_20 = arith.constant dense<0.000000e+00> : vector<8x2xf32>
    %26 = tpu.matmul %24, %25, %cst_20 {dimension_numbers = #tpu.dot_dimension_numbers<[1], [0], [0], [1], [0, 0, 1, 1], [], []>} : vector<8x64xbf16>, vector<64x2xbf16>, vector<8x2xf32> -> vector<8x2xf32>
    %c0_21 = arith.constant 0 : index
    %c0_22 = arith.constant 0 : index
    %27 = vector.load %arg9[%c0_21, %c0_22] : memref<1x2xf32, #tpu.memory_space<vmem>>, vector<1x2xf32>
    %28 = vector.broadcast %27 : vector<1x2xf32> to vector<8x2xf32>
    %29 = arith.addf %26, %28 : vector<8x2xf32>
    %30 = vector.extract_strided_slice %29 {offsets = [0, 1], sizes = [8, 1], strides = [1, 1]} : vector<8x2xf32> to vector<8x1xf32>
    %31 = vector.extract_strided_slice %29 {offsets = [0, 0], sizes = [8, 1], strides = [1, 1]} : vector<8x2xf32> to vector<8x1xf32>
    %32 = arith.subf %30, %31 : vector<8x1xf32>
    %cst_23 = arith.constant 0.000000e+00 : f32
    %33 = vector.broadcast %cst_23 : f32 to vector<8x1xf32>
    %34 = arith.subf %33, %32 : vector<8x1xf32>
    %35 = math.exp %34 : vector<8x1xf32>
    %cst_24 = arith.constant 1.000000e+00 : f32
    %36 = vector.broadcast %cst_24 : f32 to vector<8x1xf32>
    %37 = arith.addf %36, %35 : vector<8x1xf32>
    %38 = tpu.reciprocal %37 {approx = true} : vector<8x1xf32> -> vector<8x1xf32>
    %cst_25 = arith.constant 1.000000e+00 : f32
    %39 = vector.broadcast %cst_25 : f32 to vector<8x1xf32>
    %40 = arith.subf %39, %38 : vector<8x1xf32>
    %c0_26 = arith.constant 0 : index
    %c0_27 = arith.constant 0 : index
    %41 = vector.load %arg10[%c0_26, %c0_27] : memref<8x2xf32, #tpu.memory_space<vmem>>, vector<8x1xf32>
    tpu.vector_store %arg10[%c0_26, %c0_27], %40 {strides = array<i32>} : memref<8x2xf32, #tpu.memory_space<vmem>>, vector<8x1xf32>,
    %c0_28 = arith.constant 0 : index
    %c1 = arith.constant 1 : index
    %42 = vector.load %arg10[%c0_28, %c1] : memref<8x2xf32, #tpu.memory_space<vmem>>, vector<8x1xf32>
    tpu.vector_store %arg10[%c0_28, %c1], %38 {strides = array<i32>} : memref<8x2xf32, #tpu.memory_space<vmem>>, vector<8x1xf32>,
    return
  }
  func.func @transform_0(%arg0: i32) -> (i32, i32) {
    %c0_i32 = arith.constant 0 : i32
    %c0_i32_0 = arith.constant 0 : i32
    return %arg0, %c0_i32 : i32, i32
  }
  func.func @transform_1(%arg0: i32) -> (i32, i32) {
    %c0_i32 = arith.constant 0 : i32
    %c0_i32_0 = arith.constant 0 : i32
    %c0_i32_1 = arith.constant 0 : i32
    return %c0_i32, %c0_i32_0 : i32, i32
  }
  func.func @transform_2(%arg0: i32) -> (i32, i32) {
    %c0_i32 = arith.constant 0 : i32
    %c0_i32_0 = arith.constant 0 : i32
    %c0_i32_1 = arith.constant 0 : i32
    return %c0_i32, %c0_i32_0 : i32, i32
  }
  func.func @transform_3(%arg0: i32) -> (i32, i32) {
    %c0_i32 = arith.constant 0 : i32
    %c0_i32_0 = arith.constant 0 : i32
    %c0_i32_1 = arith.constant 0 : i32
    return %c0_i32, %c0_i32_0 : i32, i32
  }
  func.func @transform_4(%arg0: i32) -> (i32, i32) {
    %c0_i32 = arith.constant 0 : i32
    %c0_i32_0 = arith.constant 0 : i32
    %c0_i32_1 = arith.constant 0 : i32
    return %c0_i32, %c0_i32_0 : i32, i32
  }
  func.func @transform_5(%arg0: i32) -> (i32, i32) {
    %c0_i32 = arith.constant 0 : i32
    %c0_i32_0 = arith.constant 0 : i32
    %c0_i32_1 = arith.constant 0 : i32
    return %c0_i32, %c0_i32_0 : i32, i32
  }
  func.func @transform_6(%arg0: i32) -> (i32, i32) {
    %c0_i32 = arith.constant 0 : i32
    %c0_i32_0 = arith.constant 0 : i32
    %c0_i32_1 = arith.constant 0 : i32
    return %c0_i32, %c0_i32_0 : i32, i32
  }
  func.func @transform_7(%arg0: i32) -> (i32, i32) {
    %c0_i32 = arith.constant 0 : i32
    %c0_i32_0 = arith.constant 0 : i32
    %c0_i32_1 = arith.constant 0 : i32
    return %c0_i32, %c0_i32_0 : i32, i32
  }
  func.func @transform_8(%arg0: i32) -> (i32, i32) {
    %c0_i32 = arith.constant 0 : i32
    %c0_i32_0 = arith.constant 0 : i32
    %c0_i32_1 = arith.constant 0 : i32
    return %c0_i32, %c0_i32_0 : i32, i32
  }
  func.func @transform_9(%arg0: i32) -> (i32, i32) {
    %c0_i32 = arith.constant 0 : i32
    %c0_i32_0 = arith.constant 0 : i32
    return %arg0, %c0_i32 : i32, i32
  }
}

</mosaic_0001>

<llo_original>
// kernel: tpu_custom_call.1
$region0: #{tpu_custom_call.1}
  #allocation0 [shape = 'u32[]', space=smem, size = 0x4, offset = 0x4, fixed_abs, tag = 'smem constant byte address 0x4 - core index']
  #allocation1 [shape = 'u32[144,128]{1,0:T(1,128)}', space=vmem, size = 0x12000, scoped, tag = 'internal scratch']
  %s0 = inlined_call_operand.hbm [shape: bf16[8,23], index: 0, kind: input, shape index: {}]
  %s1 = inlined_call_operand.vmem [shape: bf16[23,64], index: 1, kind: input, shape index: {}]
  %s2 = inlined_call_operand.hbm [shape: f32[1,64], index: 2, kind: input, shape index: {}]
  %s3 = inlined_call_operand.vmem [shape: bf16[64,64], index: 3, kind: input, shape index: {}]
  %s4 = inlined_call_operand.vmem [shape: f32[1,64], index: 4, kind: input, shape index: {}]
  %s5 = inlined_call_operand.hbm [shape: bf16[64,64], index: 5, kind: input, shape index: {}]
  %s6 = inlined_call_operand.vmem [shape: f32[1,64], index: 6, kind: input, shape index: {}]
  %s7 = inlined_call_operand.vmem [shape: bf16[64,2], index: 7, kind: input, shape index: {}]
  %s8 = inlined_call_operand.vmem [shape: f32[1,2], index: 8, kind: input, shape index: {}]
  %s9 = inlined_call_operand.vmem [shape: f32[8,2], index: 9, kind: output, shape index: {}]
  %s10 = sld [smem:[#allocation0]]
  $region58: #{tpu_custom_call.1} parent=0
    _
  %s12 = ssub.s32 1, %s10
  %s13 = scalar_select 0, %s12, %s10
  $region1: #{tpu_custom_call.1} parent=0
    #allocation2 [shape = 'u8[2048]{0}', space=vmem, size = 0x800, scoped, tag = 'input window, operand 0, single buffered']
    #allocation3 [shape = 's32[1]{0}', space=sflag, size = 0x4, scoped, tag = 'scoped memory for tpu_custom_call.1']
    #allocation4 [shape = 'u8[512]{0}', space=vmem, size = 0x400, scoped, tag = 'input window, operand 2, single buffered']
    #allocation5 [shape = 's32[1]{0}', space=sflag, size = 0x4, scoped, tag = 'scoped memory for tpu_custom_call.1']
    #allocation6 [shape = 'u8[16384]{0}', space=vmem, size = 0x4000, scoped, tag = 'input window, operand 5, single buffered']
    %14 = vsyncpa [#allocation3], 0
    %15 = vsyncpa [#allocation5], 0
    // Predicated region
    $region2: #{tpu_custom_call.1} parent=1 // pred_check
      _
    $region3: #{tpu_custom_call.1} parent=1 // pred_check_branch
      %17 = sbr.rel (0) target = $region5
    $region4: #{tpu_custom_call.1} parent=1 // pred_region
      %s19 = ssub.s32 64, 64
      %20 = vsyncadd [#allocation3], %s19
      %s22 = sshll.u32 [#allocation2], 4
      %s23 = int_to_ptr.vmem [resolvable:$true] %s22
      %25 = dma.hbm_to_vmem [thread:$0]  %s0, 64, %s23, [#allocation3]
    $region5: #{tpu_custom_call.1} parent=1 // pred_fallthru
      _
    // Predicated region
    $region6: #{tpu_custom_call.1} parent=1 // pred_check
      _
    $region7: #{tpu_custom_call.1} parent=1 // pred_check_branch
      %27 = sbr.rel (0) target = $region9
    $region8: #{tpu_custom_call.1} parent=1 // pred_region
      _
    $region9: #{tpu_custom_call.1} parent=1 // pred_fallthru
      _
    // Predicated region
    $region10: #{tpu_custom_call.1} parent=1 // pred_check
      _
    $region11: #{tpu_custom_call.1} parent=1 // pred_check_branch
      %29 = sbr.rel (0) target = $region13
    $region12: #{tpu_custom_call.1} parent=1 // pred_region
      %s31 = ssub.s32 16, 16
      %32 = vsyncadd [#allocation5], %s31
      %s34 = sshll.u32 [#allocation4], 4
      %s35 = int_to_ptr.vmem [resolvable:$true] %s34
      %37 = dma.hbm_to_vmem [thread:$0]  %s2, 16, %s35, [#allocation5]
    $region13: #{tpu_custom_call.1} parent=1 // pred_fallthru
      _
    // Predicated region
    $region14: #{tpu_custom_call.1} parent=1 // pred_check
      _
    $region15: #{tpu_custom_call.1} parent=1 // pred_check_branch
      %39 = sbr.rel (0) target = $region17
    $region16: #{tpu_custom_call.1} parent=1 // pred_region
      _
    $region17: #{tpu_custom_call.1} parent=1 // pred_fallthru
      _
    // Predicated region
    $region18: #{tpu_custom_call.1} parent=1 // pred_check
      _
    $region19: #{tpu_custom_call.1} parent=1 // pred_check_branch
      %41 = sbr.rel (0) target = $region21
    $region20: #{tpu_custom_call.1} parent=1 // pred_region
      _
    $region21: #{tpu_custom_call.1} parent=1 // pred_fallthru
      _
    // Predicated region
    $region22: #{tpu_custom_call.1} parent=1 // pred_check
      _
    $region23: #{tpu_custom_call.1} parent=1 // pred_check_branch
      %43 = sbr.rel (0) target = $region25
    $region24: #{tpu_custom_call.1} parent=1 // pred_region
      %s45 = ssub.s32 512, 512
      %46 = vsyncadd [#allocation5], %s45
      %s47 = sshll.u32 [#allocation6], 4
      %s48 = int_to_ptr.vmem [resolvable:$true] %s47
      %53 = dma.hbm_to_vmem [thread:$0]  %s5, 512, %s48, [#allocation5], 64, 64, 4
    $region25: #{tpu_custom_call.1} parent=1 // pred_fallthru
      _
    // Predicated region
    $region26: #{tpu_custom_call.1} parent=1 // pred_check
      _
    $region27: #{tpu_custom_call.1} parent=1 // pred_check_branch
      %55 = sbr.rel (0) target = $region29
    $region28: #{tpu_custom_call.1} parent=1 // pred_region
      _
    $region29: #{tpu_custom_call.1} parent=1 // pred_fallthru
      _
    // Predicated region
    $region30: #{tpu_custom_call.1} parent=1 // pred_check
      _
    $region31: #{tpu_custom_call.1} parent=1 // pred_check_branch
      %57 = sbr.rel (0) target = $region33
    $region32: #{tpu_custom_call.1} parent=1 // pred_region
      _
    $region33: #{tpu_custom_call.1} parent=1 // pred_fallthru
      _
    // Predicated region
    $region34: #{tpu_custom_call.1} parent=1 // pred_check
      _
    $region35: #{tpu_custom_call.1} parent=1 // pred_check_branch
      %59 = sbr.rel (0) target = $region37
    $region36: #{tpu_custom_call.1} parent=1 // pred_region
      _
    $region37: #{tpu_custom_call.1} parent=1 // pred_fallthru
      _
    // Predicated region
    $region38: #{tpu_custom_call.1} parent=1 // pred_check
      _
    $region39: #{tpu_custom_call.1} parent=1 // pred_check_branch
      %61 = sbr.rel (0) target = $region41
    $region40: #{tpu_custom_call.1} parent=1 // pred_region
      %62 = dma.done [#allocation3], 64
    $region41: #{tpu_custom_call.1} parent=1 // pred_fallthru
      _
    // Predicated region
    $region42: #{tpu_custom_call.1} parent=1 // pred_check
      _
    $region43: #{tpu_custom_call.1} parent=1 // pred_check_branch
      %64 = sbr.rel (0) target = $region45
    $region44: #{tpu_custom_call.1} parent=1 // pred_region
      %65 = dma.done [#allocation5], 16
    $region45: #{tpu_custom_call.1} parent=1 // pred_fallthru
      _
    // Predicated region
    $region46: #{tpu_custom_call.1} parent=1 // pred_check
      _
    $region47: #{tpu_custom_call.1} parent=1 // pred_check_branch
      %67 = sbr.rel (0) target = $region49
    $region48: #{tpu_custom_call.1} parent=1 // pred_region
      %68 = dma.done [#allocation5], 512
    $region49: #{tpu_custom_call.1} parent=1 // pred_fallthru
      _
    %v70 = vld [vmem:[#allocation2] sm:$0xf]
    %v71 = vld [vmem:[%s1] sm:$0xf]
    %v72 = vld [vmem:[%s1 + $0x4] sm:$0xf]
    %v73 = vld [vmem:[%s1 + $0x8] sm:$0xf]
    %v74 = vld [vmem:[#allocation4] sm:$0x1]
    %v76 = vlaneseq
    %v77 = vshrl.u32 %v76, 7
    %v78 = vsub.s32 0, %v77
    %v79 = vrot.slane %v74, %v78
    %v84 = vunpack.c.l.b16 %v71
    %v85 = vunpack.c.l.b16 %v72
    %v86 = vunpack.c.l.b16 %v73
    %v87 = vpack.c.b16 %v85, %v84
    %v88 = vpack.c.b16 %v86, %v86
    %vm90 = vcmask 187392
    %v92 = vsel %vm90, %v70, 0
    %vm94 = vcmask 1042432
    %vm95 = vcmask 1043456
    %v96 = vsel %vm94, 4294967295, 65535
    %v97 = vsel %vm95, %v96, 0
    %v99 = vand.u32 %v88, %v97
    %101 = vmatprep.subr.bf16.mxu0 0
    %102 = vmatpush1.bf16.msra.mxu0 %v87
    %103 = vmatprep.subr.bf16.mxu0 0
    %104 = vmatpush1.bf16.msra.mxu0 %v99
    %105 = vmatprep.subr.bf16.mxu0 0
    %106 = vmatpush1.bf16.msra.mxu0 0
    %107 = vmatprep.subr.bf16.mxu0 0
    %108 = vmatpush1.bf16.msra.mxu0 0
    %109 = vmatprep.subr.bf16.mxu0 0
    %110 = vmatpush1.bf16.msra.mxu0 0
    %111 = vmatprep.subr.bf16.mxu0 0
    %112 = vmatpush1.bf16.msra.mxu0 0
    %113 = vmatprep.subr.bf16.mxu0 0
    %114 = vmatpush1.bf16.msra.mxu0 0
    %115 = vmatprep.subr.bf16.mxu0 0
    %116 = vmatpush1.bf16.msra.mxu0 0
    %117 = vmatprep.subr.bf16.mxu0 0
    %118 = vmatpush1.bf16.msra.mxu0 0
    %119 = vmatprep.subr.bf16.mxu0 0
    %120 = vmatpush1.bf16.msra.mxu0 0
    %121 = vmatprep.subr.bf16.mxu0 0
    %122 = vmatpush1.bf16.msra.mxu0 0
    %123 = vmatprep.subr.bf16.mxu0 0
    %124 = vmatpush1.bf16.msra.mxu0 0
    %125 = vmatprep.subr.bf16.mxu0 0
    %126 = vmatpush1.bf16.msra.mxu0 0
    %127 = vmatprep.subr.bf16.mxu0 0
    %128 = vmatpush1.bf16.msra.mxu0 0
    %129 = vmatprep.subr.bf16.mxu0 0
    %130 = vmatpush1.bf16.msra.mxu0 0
    %131 = vmatprep.subr.bf16.mxu0 0
    %132 = vmatpush1.bf16.msra.mxu0 0
    %133 = vmatprep.mubr.bf16.mxu0 0
    %134 = vmatmul.mubr.bf16.gmra.mrb[0].mxu0 %v92
    %v135 = vpop.f32.mrb[0].mxu0
    %v136 = vadd.f32 %v79, %v135
    %v137 = vpop.f32.mrb[0].mxu0
    %v138 = vpop.f32.mrb[0].mxu0
    %v139 = vpop.f32.mrb[0].mxu0
    %140 = vdwg.mxu0
    %v141 = vmax.f32 %v136, 0.0
    %v142 = vpack.c.bf16 %v141, %v141
    %v143 = vld [vmem:[%s3] sm:$0xf]
    %v144 = vld [vmem:[%s3 + $0x4] sm:$0xf]
    %v145 = vld [vmem:[%s3 + $0x8] sm:$0xf]
    %v146 = vld [vmem:[%s3 + $0xc] sm:$0xf]
    %v147 = vld [vmem:[%s3 + $0x10] sm:$0xf]
    %v148 = vld [vmem:[%s3 + $0x14] sm:$0xf]
    %v149 = vld [vmem:[%s3 + $0x18] sm:$0xf]
    %v150 = vld [vmem:[%s3 + $0x1c] sm:$0xf]
    %v151 = vld [vmem:[%s4] sm:$0x1]
    %v153 = vlaneseq
    %v154 = vshrl.u32 %v153, 7
    %v155 = vsub.s32 0, %v154
    %v156 = vrot.slane %v151, %v155
    %v166 = vunpack.c.l.b16 %v143
    %v167 = vunpack.c.l.b16 %v144
    %v168 = vunpack.c.l.b16 %v145
    %v169 = vunpack.c.l.b16 %v146
    %v170 = vunpack.c.l.b16 %v147
    %v171 = vunpack.c.l.b16 %v148
    %v172 = vunpack.c.l.b16 %v149
    %v173 = vunpack.c.l.b16 %v150
    %v174 = vpack.c.b16 %v167, %v166
    %v175 = vpack.c.b16 %v169, %v168
    %v176 = vpack.c.b16 %v171, %v170
    %v177 = vpack.c.b16 %v173, %v172
    %vm182 = vcmask 523264
    %v184 = vsel %vm182, %v142, 0
    %186 = vmatprep.subr.bf16.mxu0 0
    %187 = vmatpush1.bf16.msra.mxu0 %v174
    %188 = vmatprep.subr.bf16.mxu0 0
    %189 = vmatpush1.bf16.msra.mxu0 %v175
    %190 = vmatprep.subr.bf16.mxu0 0
    %191 = vmatpush1.bf16.msra.mxu0 %v176
    %192 = vmatprep.subr.bf16.mxu0 0
    %193 = vmatpush1.bf16.msra.mxu0 %v177
    %194 = vmatprep.subr.bf16.mxu0 0
    %195 = vmatpush1.bf16.msra.mxu0 0
    %196 = vmatprep.subr.bf16.mxu0 0
    %197 = vmatpush1.bf16.msra.mxu0 0
    %198 = vmatprep.subr.bf16.mxu0 0
    %199 = vmatpush1.bf16.msra.mxu0 0
    %200 = vmatprep.subr.bf16.mxu0 0
    %201 = vmatpush1.bf16.msra.mxu0 0
    %202 = vmatprep.subr.bf16.mxu0 0
    %203 = vmatpush1.bf16.msra.mxu0 0
    %204 = vmatprep.subr.bf16.mxu0 0
    %205 = vmatpush1.bf16.msra.mxu0 0
    %206 = vmatprep.subr.bf16.mxu0 0
    %207 = vmatpush1.bf16.msra.mxu0 0
    %208 = vmatprep.subr.bf16.mxu0 0
    %209 = vmatpush1.bf16.msra.mxu0 0
    %210 = vmatprep.subr.bf16.mxu0 0
    %211 = vmatpush1.bf16.msra.mxu0 0
    %212 = vmatprep.subr.bf16.mxu0 0
    %213 = vmatpush1.bf16.msra.mxu0 0
    %214 = vmatprep.subr.bf16.mxu0 0
    %215 = vmatpush1.bf16.msra.mxu0 0
    %216 = vmatprep.subr.bf16.mxu0 0
    %217 = vmatpush1.bf16.msra.mxu0 0
    %218 = vmatprep.mubr.bf16.mxu0 0
    %219 = vmatmul.mubr.bf16.gmra.mrb[0].mxu0 %v184
    %v220 = vpop.f32.mrb[0].mxu0
    %v221 = vadd.f32 %v156, %v220
    %v222 = vpop.f32.mrb[0].mxu0
    %v223 = vpop.f32.mrb[0].mxu0
    %v224 = vpop.f32.mrb[0].mxu0
    %225 = vdwg.mxu0
    %v226 = vmax.f32 %v221, 0.0
    %v227 = vpack.c.bf16 %v226, %v226
    %v228 = vld [vmem:[#allocation6] sm:$0xf]
    %v229 = vld [vmem:[#allocation6 + $0x4] sm:$0xf]
    %v230 = vld [vmem:[#allocation6 + $0x8] sm:$0xf]
    %v231 = vld [vmem:[#allocation6 + $0xc] sm:$0xf]
    %v232 = vld [vmem:[#allocation6 + $0x10] sm:$0xf]
    %v233 = vld [vmem:[#allocation6 + $0x14] sm:$0xf]
    %v234 = vld [vmem:[#allocation6 + $0x18] sm:$0xf]
    %v235 = vld [vmem:[#allocation6 + $0x1c] sm:$0xf]
    %v236 = vld [vmem:[%s6] sm:$0x1]
    %v238 = vlaneseq
    %v239 = vshrl.u32 %v238, 7
    %v240 = vsub.s32 0, %v239
    %v241 = vrot.slane %v236, %v240
    %v251 = vunpack.c.l.b16 %v228
    %v252 = vunpack.c.l.b16 %v229
    %v253 = vunpack.c.l.b16 %v230
    %v254 = vunpack.c.l.b16 %v231
    %v255 = vunpack.c.l.b16 %v232
    %v256 = vunpack.c.l.b16 %v233
    %v257 = vunpack.c.l.b16 %v234
    %v258 = vunpack.c.l.b16 %v235
    %v259 = vpack.c.b16 %v252, %v251
    %v260 = vpack.c.b16 %v254, %v253
    %v261 = vpack.c.b16 %v256, %v255
    %v262 = vpack.c.b16 %v258, %v257
    %v268 = vsel %vm182, %v227, 0
    %270 = vmatprep.subr.bf16.mxu0 0
    %271 = vmatpush1.bf16.msra.mxu0 %v259
    %272 = vmatprep.subr.bf16.mxu0 0
    %273 = vmatpush1.bf16.msra.mxu0 %v260
    %274 = vmatprep.subr.bf16.mxu0 0
    %275 = vmatpush1.bf16.msra.mxu0 %v261
    %276 = vmatprep.subr.bf16.mxu0 0
    %277 = vmatpush1.bf16.msra.mxu0 %v262
    %278 = vmatprep.subr.bf16.mxu0 0
    %279 = vmatpush1.bf16.msra.mxu0 0
    %280 = vmatprep.subr.bf16.mxu0 0
    %281 = vmatpush1.bf16.msra.mxu0 0
    %282 = vmatprep.subr.bf16.mxu0 0
    %283 = vmatpush1.bf16.msra.mxu0 0
    %284 = vmatprep.subr.bf16.mxu0 0
    %285 = vmatpush1.bf16.msra.mxu0 0
    %286 = vmatprep.subr.bf16.mxu0 0
    %287 = vmatpush1.bf16.msra.mxu0 0
    %288 = vmatprep.subr.bf16.mxu0 0
    %289 = vmatpush1.bf16.msra.mxu0 0
    %290 = vmatprep.subr.bf16.mxu0 0
    %291 = vmatpush1.bf16.msra.mxu0 0
    %292 = vmatprep.subr.bf16.mxu0 0
    %293 = vmatpush1.bf16.msra.mxu0 0
    %294 = vmatprep.subr.bf16.mxu0 0
    %295 = vmatpush1.bf16.msra.mxu0 0
    %296 = vmatprep.subr.bf16.mxu0 0
    %297 = vmatpush1.bf16.msra.mxu0 0
    %298 = vmatprep.subr.bf16.mxu0 0
    %299 = vmatpush1.bf16.msra.mxu0 0
    %300 = vmatprep.subr.bf16.mxu0 0
    %301 = vmatpush1.bf16.msra.mxu0 0
    %302 = vmatprep.mubr.bf16.mxu0 0
    %303 = vmatmul.mubr.bf16.gmra.mrb[0].mxu0 %v268
    %v304 = vpop.f32.mrb[0].mxu0
    %v305 = vadd.f32 %v241, %v304
    %v306 = vpop.f32.mrb[0].mxu0
    %v307 = vpop.f32.mrb[0].mxu0
    %v308 = vpop.f32.mrb[0].mxu0
    %309 = vdwg.mxu0
    %v310 = vmax.f32 %v305, 0.0
    %v311 = vpack.c.bf16 %v310, %v310
    %v312 = vld [vmem:[%s7] sm:$0xf]
    %v313 = vld [vmem:[%s7 + $0x4] sm:$0xf]
    %v314 = vld [vmem:[%s7 + $0x8] sm:$0xf]
    %v315 = vld [vmem:[%s7 + $0xc] sm:$0xf]
    %v316 = vld [vmem:[%s7 + $0x10] sm:$0xf]
    %v317 = vld [vmem:[%s7 + $0x14] sm:$0xf]
    %v318 = vld [vmem:[%s7 + $0x18] sm:$0xf]
    %v319 = vld [vmem:[%s7 + $0x1c] sm:$0xf]
    %v320 = vld [vmem:[%s8] sm:$0x1]
    %v322 = vlaneseq
    %v323 = vshrl.u32 %v322, 7
    %v324 = vsub.s32 0, %v323
    %v325 = vrot.slane %v320, %v324
    %v335 = vunpack.c.l.b16 %v312
    %v336 = vunpack.c.l.b16 %v313
    %v337 = vunpack.c.l.b16 %v314
    %v338 = vunpack.c.l.b16 %v315
    %v339 = vunpack.c.l.b16 %v316
    %v340 = vunpack.c.l.b16 %v317
    %v341 = vunpack.c.l.b16 %v318
    %v342 = vunpack.c.l.b16 %v319
    %v343 = vpack.c.b16 %v336, %v335
    %v344 = vpack.c.b16 %v338, %v337
    %v345 = vpack.c.b16 %v340, %v339
    %v346 = vpack.c.b16 %v342, %v341
    %v352 = vsel %vm182, %v311, 0
    %354 = vmatprep.subr.bf16.mxu0 0
    %355 = vmatpush1.bf16.msra.mxu0 %v343
    %356 = vmatprep.subr.bf16.mxu0 0
    %357 = vmatpush1.bf16.msra.mxu0 %v344
    %358 = vmatprep.subr.bf16.mxu0 0
    %359 = vmatpush1.bf16.msra.mxu0 %v345
    %360 = vmatprep.subr.bf16.mxu0 0
    %361 = vmatpush1.bf16.msra.mxu0 %v346
    %362 = vmatprep.subr.bf16.mxu0 0
    %363 = vmatpush1.bf16.msra.mxu0 0
    %364 = vmatprep.subr.bf16.mxu0 0
    %365 = vmatpush1.bf16.msra.mxu0 0
    %366 = vmatprep.subr.bf16.mxu0 0
    %367 = vmatpush1.bf16.msra.mxu0 0
    %368 = vmatprep.subr.bf16.mxu0 0
    %369 = vmatpush1.bf16.msra.mxu0 0
    %370 = vmatprep.subr.bf16.mxu0 0
    %371 = vmatpush1.bf16.msra.mxu0 0
    %372 = vmatprep.subr.bf16.mxu0 0
    %373 = vmatpush1.bf16.msra.mxu0 0
    %374 = vmatprep.subr.bf16.mxu0 0
    %375 = vmatpush1.bf16.msra.mxu0 0
    %376 = vmatprep.subr.bf16.mxu0 0
    %377 = vmatpush1.bf16.msra.mxu0 0
    %378 = vmatprep.subr.bf16.mxu0 0
    %379 = vmatpush1.bf16.msra.mxu0 0
    %380 = vmatprep.subr.bf16.mxu0 0
    %381 = vmatpush1.bf16.msra.mxu0 0
    %382 = vmatprep.subr.bf16.mxu0 0
    %383 = vmatpush1.bf16.msra.mxu0 0
    %384 = vmatprep.subr.bf16.mxu0 0
    %385 = vmatpush1.bf16.msra.mxu0 0
    %386 = vmatprep.mubr.bf16.mxu0 0
    %387 = vmatmul.mubr.bf16.gmra.mrb[0].mxu0 %v352
    %v388 = vpop.f32.mrb[0].mxu0
    %v389 = vadd.f32 %v325, %v388
    %v390 = vpop.f32.mrb[0].mxu0
    %v391 = vpop.f32.mrb[0].mxu0
    %v392 = vpop.f32.mrb[0].mxu0
    %393 = vdwg.mxu0
    %395 = vrot.lane.b32.xlu0 %v389, 1
    %v396 = vpop.permute.xlu0 %395
    %v398 = vsub.f32 %v389, %v396
    %v399 = vsub.f32 0.0, %v398
    %v400 = vmul.f32 %v399, 1.442695
    %v401 = vpow.pop %v400
    %v402 = vadd.f32 %v401, 1.0
    %v403 = vrcp.pop %v402
    %v404 = vsub.f32 1.0, %v403
    %406 = vrot.lane.b32.xlu0 %v404, 127
    %v407 = vpop.permute.xlu0 %406
    %vm409 = vcmask 7168
    %410 = vst.msk [vmem:[%s9] sm:$0xff] %vm409, %v407
    %vm411 = vcmask 15368
    %412 = vst.msk [vmem:[%s9] sm:$0xff] %vm411, %v403
    // Predicated region
    $region50: #{tpu_custom_call.1} parent=1 // pred_check
      _
    $region51: #{tpu_custom_call.1} parent=1 // pred_check_branch
      %414 = sbr.rel (0) target = $region53
    $region52: #{tpu_custom_call.1} parent=1 // pred_region
      _
    $region53: #{tpu_custom_call.1} parent=1 // pred_fallthru
      _
    // Predicated region
    $region54: #{tpu_custom_call.1} parent=1 // pred_check
      _
    $region55: #{tpu_custom_call.1} parent=1 // pred_check_branch
      %416 = sbr.rel (0) target = $region57
    $region56: #{tpu_custom_call.1} parent=1 // pred_region
      _
    $region57: #{tpu_custom_call.1} parent=1 // pred_fallthru
      _
    %417 = vsyncpa [#allocation3], 1
    %418 = vsyncpa [#allocation5], 1

</llo_original>
